<compile_context>
chip_gen: v6e
topology: v6e:2x2x1
jax: 0.10.0
libtpu: 0.0.40
codegen_flags: <defaults>
</compile_context>

<pallas_src>
import jax
import jax.numpy as jnp
from jax.experimental import pallas as pl
from jax.experimental.pallas import tpu as pltpu

B, C, H, W = 2, 4, 16, 16
D_IN = C * H * W          # 1024
LATENT = 32
SLAB = 128                # lane-dense packed latent width: [mu|logvar|vec|pad]


def vae_fwd_kernel(x_ref, wenc_ref, benc_ref, wdec_ref, bdec_ref, eps_ref,
                   xhat_ref, lat_ref):
    x = x_ref[...]                                            # (tb, D_IN) bf16

    # Fused encoder: one MXU pass, N = 128 (cols: mu | logvar | 0 | 0).
    enc = jnp.dot(x, wenc_ref[...],
                  preferred_element_type=jnp.float32) + benc_ref[...]

    mu = enc[:, :LATENT]                                      # (tb, 32) f32
    logvar = enc[:, LATENT:2 * LATENT]                        # (tb, 32) f32

    # reparameterize(mu, logvar): std = exp(0.5*logvar); vec = mu + eps*std
    std = jnp.exp(0.5 * logvar)                               # EUP, f32
    vec = mu + eps_ref[...] * std

    # Lane-dense latent slab: [mu | logvar | vec | 0]  -> (tb, 128)
    slab = jnp.concatenate([mu, logvar, vec, jnp.zeros_like(vec)], axis=-1)

    # Decoder: slab @ wdec_p.  Rows [64:96) of wdec_p hold w_dec; all other
    # rows are zero, so mu/logvar/pad lanes contribute exactly nothing.
    xhat = jnp.dot(slab.astype(jnp.bfloat16), wdec_ref[...],
                   preferred_element_type=jnp.float32) + bdec_ref[...]

    xhat_ref[...] = xhat                                      # (tb, D_IN)
    lat_ref[...] = slab                                       # (tb, 128)


def _pack_params(params):
    """Fuse/zero-pad the weights into lane-dense bf16 MXU operands."""
    w_mu, b_mu, w_lv, b_lv, w_dec, b_dec = params
    w_enc = jnp.zeros((D_IN, SLAB), jnp.float32)
    w_enc = w_enc.at[:, :LATENT].set(w_mu)
    w_enc = w_enc.at[:, LATENT:2 * LATENT].set(w_lv)
    b_enc = jnp.zeros((1, SLAB), jnp.float32)
    b_enc = b_enc.at[:, :LATENT].set(b_mu[0])
    b_enc = b_enc.at[:, LATENT:2 * LATENT].set(b_lv[0])
    w_dec_p = jnp.zeros((SLAB, D_IN), jnp.float32)
    w_dec_p = w_dec_p.at[2 * LATENT:3 * LATENT, :].set(w_dec)
    return (w_enc.astype(jnp.bfloat16), b_enc,
            w_dec_p.astype(jnp.bfloat16), b_dec)


def base_vae_forward(x_nchw, params, eps):
    """x_nchw: (B, C, H, W) f32. Returns (x_hat, vec, mu, logvar) like torch."""
    b = x_nchw.shape[0]
    x_flat = x_nchw.reshape(b, -1).astype(jnp.bfloat16)       # (B, D_IN) bf16
    w_enc, b_enc, w_dec_p, b_dec = _pack_params(params)

    # Batch grid axis: weights stay VMEM-resident (constant index_map) while
    # batch tiles stream; "parallel" lets v7x shard it across its 2 TCs.
    tb = b if b <= 128 else 128
    grid = (pl.cdiv(b, tb),)

    batch_tile = lambda shape: pl.BlockSpec(shape, lambda i: (i, 0))
    resident = lambda shape: pl.BlockSpec(shape, lambda i: (0, 0))

    cost = pl.CostEstimate(
        flops=2 * b * D_IN * (2 * LATENT) + 2 * b * LATENT * D_IN,
        transcendentals=b * LATENT,
        bytes_accessed=(x_flat.size * 2 + w_enc.size * 2 + w_dec_p.size * 2
                        + b_enc.size * 4 + b_dec.size * 4 + eps.size * 4
                        + b * D_IN * 4 + b * SLAB * 4),
    )

    xhat_flat, slab = pl.pallas_call(
        vae_fwd_kernel,
        out_shape=(
            jax.ShapeDtypeStruct((b, D_IN), jnp.float32),     # x_hat (flat)
            jax.ShapeDtypeStruct((b, SLAB), jnp.float32),     # [mu|logvar|vec|0]
        ),
        grid=grid,
        in_specs=[
            batch_tile((tb, D_IN)),          # x
            resident((D_IN, SLAB)),          # fused encoder weight
            resident((1, SLAB)),             # fused encoder bias
            resident((SLAB, D_IN)),          # padded decoder weight
            resident((1, D_IN)),             # decoder bias
            batch_tile((tb, LATENT)),        # eps
        ],
        out_specs=[
            batch_tile((tb, D_IN)),
            batch_tile((tb, SLAB)),
        ],
        compiler_params=pltpu.CompilerParams(
            dimension_semantics=("parallel",)),
        cost_estimate=cost,
    )(x_flat, w_enc, b_enc, w_dec_p, b_dec, eps)

    mu = slab[:, :LATENT]
    logvar = slab[:, LATENT:2 * LATENT]
    vec = slab[:, 2 * LATENT:3 * LATENT]
    x_hat = xhat_flat.reshape(b, C, H, W)
    return x_hat, vec, mu, logvar


def init_params(key):
    k1, k2, k3 = jax.random.split(key, 3)
    scale_enc = 1.0 / jnp.sqrt(jnp.float32(D_IN))
    scale_dec = 1.0 / jnp.sqrt(jnp.float32(LATENT))
    w_mu = jax.random.normal(k1, (D_IN, LATENT), jnp.float32) * scale_enc
    b_mu = jnp.zeros((1, LATENT), jnp.float32)
    w_lv = jax.random.normal(k2, (D_IN, LATENT), jnp.float32) * scale_enc
    b_lv = jnp.zeros((1, LATENT), jnp.float32)
    w_dec = jax.random.normal(k3, (LATENT, D_IN), jnp.float32) * scale_dec
    b_dec = jnp.zeros((1, D_IN), jnp.float32)
    return (w_mu, b_mu, w_lv, b_lv, w_dec, b_dec)


if __name__ == "__main__":
    root = jax.random.PRNGKey(0)
    k_x, k_p, k_eps = jax.random.split(root, 3)

    x = jax.random.normal(k_x, (B, C, H, W), jnp.float32)     # NCHW input
    params = init_params(k_p)
    eps = jax.random.normal(k_eps, (B, LATENT), jnp.float32)  # ~ torch.randn_like(std)

    x_hat, vec, mu, logvar = jax.block_until_ready(
        jax.jit(base_vae_forward)(x, params, eps)
    )

    # Pure-JAX reference mirroring the kernel's numerics
    # (bf16 MXU operands, f32 accumulation / elementwise).
    x_flat = x.reshape(B, -1)
    xb = x_flat.astype(jnp.bfloat16)
    wmu_b = params[0].astype(jnp.bfloat16)
    wlv_b = params[2].astype(jnp.bfloat16)
    wdec_b = params[4].astype(jnp.bfloat16)
    mu_ref = jnp.dot(xb, wmu_b, preferred_element_type=jnp.float32) + params[1]
    lv_ref = jnp.dot(xb, wlv_b, preferred_element_type=jnp.float32) + params[3]
    vec_ref = mu_ref + eps * jnp.exp(0.5 * lv_ref)
    xhat_ref = (jnp.dot(vec_ref.astype(jnp.bfloat16), wdec_b,
                        preferred_element_type=jnp.float32)
                + params[5]).reshape(B, C, H, W)

    assert x_hat.shape == (B, C, H, W)
    assert vec.shape == (B, LATENT) and mu.shape == (B, LATENT)
    assert logvar.shape == (B, LATENT)
    assert bool(jnp.all(jnp.isfinite(x_hat)))
    assert jnp.allclose(mu, mu_ref, atol=1e-2)
    assert jnp.allclose(logvar, lv_ref, atol=1e-2)
    assert jnp.allclose(vec, vec_ref, atol=1e-2)
    assert jnp.allclose(x_hat, xhat_ref, atol=2e-2)

    print("KERNEL_OK")
</pallas_src>

<mosaic_0001>
module attributes {stable_mosaic.version = 11 : i64} {
  func.func @vae_fwd_kernel(%arg0: i32, %arg1: memref<2x1024xbf16, #tpu.memory_space<vmem>>, %arg2: memref<1024x128xbf16, #tpu.memory_space<vmem>>, %arg3: memref<1x128xf32, #tpu.memory_space<vmem>>, %arg4: memref<128x1024xbf16, #tpu.memory_space<vmem>>, %arg5: memref<1x1024xf32, #tpu.memory_space<vmem>>, %arg6: memref<2x32xf32, #tpu.memory_space<vmem>>, %arg7: memref<2x1024xf32, #tpu.memory_space<vmem>>, %arg8: memref<2x128xf32, #tpu.memory_space<vmem>>) attributes {dimension_semantics = [#tpu.dimension_semantics<parallel>], iteration_bounds = array<i64: 1>, scalar_prefetch = 0 : i64, scratch_operands = 0 : i64, tpu.core_type = #tpu.core_type<tc>, window_params = [{transform_indices = @transform_0, window_bounds = array<i64: 2, 1024>}, {pipeline_mode = #tpu.pipeline_mode<synchronous>, transform_indices = @transform_1, window_bounds = array<i64: 1024, 128>}, {pipeline_mode = #tpu.pipeline_mode<synchronous>, transform_indices = @transform_2, window_bounds = array<i64: 1, 128>}, {pipeline_mode = #tpu.pipeline_mode<synchronous>, transform_indices = @transform_3, window_bounds = array<i64: 128, 1024>}, {pipeline_mode = #tpu.pipeline_mode<synchronous>, transform_indices = @transform_4, window_bounds = array<i64: 1, 1024>}, {transform_indices = @transform_5, window_bounds = array<i64: 2, 32>}, {transform_indices = @transform_6, window_bounds = array<i64: 2, 1024>}, {transform_indices = @transform_7, window_bounds = array<i64: 2, 128>}]} {
    %c0 = arith.constant 0 : index
    %c0_0 = arith.constant 0 : index
    %0 = vector.load %arg1[%c0, %c0_0] : memref<2x1024xbf16, #tpu.memory_space<vmem>>, vector<2x1024xbf16>
    %c0_1 = arith.constant 0 : index
    %c0_2 = arith.constant 0 : index
    %1 = vector.load %arg2[%c0_1, %c0_2] : memref<1024x128xbf16, #tpu.memory_space<vmem>>, vector<1024x128xbf16>
    %cst = arith.constant dense<0.000000e+00> : vector<2x128xf32>
    %2 = tpu.matmul %0, %1, %cst {dimension_numbers = #tpu.dot_dimension_numbers<[1], [0], [0], [1], [0, 0, 1, 1], [], []>} : vector<2x1024xbf16>, vector<1024x128xbf16>, vector<2x128xf32> -> vector<2x128xf32>
    %c0_3 = arith.constant 0 : index
    %c0_4 = arith.constant 0 : index
    %3 = vector.load %arg3[%c0_3, %c0_4] : memref<1x128xf32, #tpu.memory_space<vmem>>, vector<1x128xf32>
    %4 = vector.broadcast %3 : vector<1x128xf32> to vector<2x128xf32>
    %5 = arith.addf %2, %4 : vector<2x128xf32>
    %6 = vector.extract_strided_slice %5 {offsets = [0, 0], sizes = [2, 32], strides = [1, 1]} : vector<2x128xf32> to vector<2x32xf32>
    %7 = vector.extract_strided_slice %5 {offsets = [0, 32], sizes = [2, 32], strides = [1, 1]} : vector<2x128xf32> to vector<2x32xf32>
    %cst_5 = arith.constant 5.000000e-01 : f32
    %8 = vector.broadcast %cst_5 : f32 to vector<2x32xf32>
    %9 = arith.mulf %8, %7 : vector<2x32xf32>
    %10 = math.exp %9 : vector<2x32xf32>
    %c0_6 = arith.constant 0 : index
    %c0_7 = arith.constant 0 : index
    %11 = vector.load %arg6[%c0_6, %c0_7] : memref<2x32xf32, #tpu.memory_space<vmem>>, vector<2x32xf32>
    %12 = arith.mulf %11, %10 : vector<2x32xf32>
    %13 = arith.addf %6, %12 : vector<2x32xf32>
    %cst_8 = arith.constant 0.000000e+00 : f32
    %14 = vector.broadcast %cst_8 : f32 to vector<2x32xf32>
    %15 = tpu.concatenate %6, %7, %13, %14 in 1 : vector<2x32xf32>, vector<2x32xf32>, vector<2x32xf32>, vector<2x32xf32> -> vector<2x128xf32>
    %16 = arith.truncf %15 : vector<2x128xf32> to vector<2x128xbf16>
    %c0_9 = arith.constant 0 : index
    %c0_10 = arith.constant 0 : index
    %17 = vector.load %arg4[%c0_9, %c0_10] : memref<128x1024xbf16, #tpu.memory_space<vmem>>, vector<128x1024xbf16>
    %cst_11 = arith.constant dense<0.000000e+00> : vector<2x1024xf32>
    %18 = tpu.matmul %16, %17, %cst_11 {dimension_numbers = #tpu.dot_dimension_numbers<[1], [0], [0], [1], [0, 0, 1, 1], [], []>} : vector<2x128xbf16>, vector<128x1024xbf16>, vector<2x1024xf32> -> vector<2x1024xf32>
    %c0_12 = arith.constant 0 : index
    %c0_13 = arith.constant 0 : index
    %19 = vector.load %arg5[%c0_12, %c0_13] : memref<1x1024xf32, #tpu.memory_space<vmem>>, vector<1x1024xf32>
    %20 = vector.broadcast %19 : vector<1x1024xf32> to vector<2x1024xf32>
    %21 = arith.addf %18, %20 : vector<2x1024xf32>
    %c0_14 = arith.constant 0 : index
    %c0_15 = arith.constant 0 : index
    %22 = vector.load %arg7[%c0_14, %c0_15] : memref<2x1024xf32, #tpu.memory_space<vmem>>, vector<2x1024xf32>
    tpu.vector_store %arg7[%c0_14, %c0_15], %21 {strides = array<i32>} : memref<2x1024xf32, #tpu.memory_space<vmem>>, vector<2x1024xf32>,
    %c0_16 = arith.constant 0 : index
    %c0_17 = arith.constant 0 : index
    %23 = vector.load %arg8[%c0_16, %c0_17] : memref<2x128xf32, #tpu.memory_space<vmem>>, vector<2x128xf32>
    tpu.vector_store %arg8[%c0_16, %c0_17], %15 {strides = array<i32>} : memref<2x128xf32, #tpu.memory_space<vmem>>, vector<2x128xf32>,
    return
  }
  func.func @transform_0(%arg0: i32) -> (i32, i32) {
    %c0_i32 = arith.constant 0 : i32
    %c0_i32_0 = arith.constant 0 : i32
    return %arg0, %c0_i32 : i32, i32
  }
  func.func @transform_1(%arg0: i32) -> (i32, i32) {
    %c0_i32 = arith.constant 0 : i32
    %c0_i32_0 = arith.constant 0 : i32
    %c0_i32_1 = arith.constant 0 : i32
    return %c0_i32, %c0_i32_0 : i32, i32
  }
  func.func @transform_2(%arg0: i32) -> (i32, i32) {
    %c0_i32 = arith.constant 0 : i32
    %c0_i32_0 = arith.constant 0 : i32
    %c0_i32_1 = arith.constant 0 : i32
    return %c0_i32, %c0_i32_0 : i32, i32
  }
  func.func @transform_3(%arg0: i32) -> (i32, i32) {
    %c0_i32 = arith.constant 0 : i32
    %c0_i32_0 = arith.constant 0 : i32
    %c0_i32_1 = arith.constant 0 : i32
    return %c0_i32, %c0_i32_0 : i32, i32
  }
  func.func @transform_4(%arg0: i32) -> (i32, i32) {
    %c0_i32 = arith.constant 0 : i32
    %c0_i32_0 = arith.constant 0 : i32
    %c0_i32_1 = arith.constant 0 : i32
    return %c0_i32, %c0_i32_0 : i32, i32
  }
  func.func @transform_5(%arg0: i32) -> (i32, i32) {
    %c0_i32 = arith.constant 0 : i32
    %c0_i32_0 = arith.constant 0 : i32
    return %arg0, %c0_i32 : i32, i32
  }
  func.func @transform_6(%arg0: i32) -> (i32, i32) {
    %c0_i32 = arith.constant 0 : i32
    %c0_i32_0 = arith.constant 0 : i32
    return %arg0, %c0_i32 : i32, i32
  }
  func.func @transform_7(%arg0: i32) -> (i32, i32) {
    %c0_i32 = arith.constant 0 : i32
    %c0_i32_0 = arith.constant 0 : i32
    return %arg0, %c0_i32 : i32, i32
  }
}

</mosaic_0001>

<llo_original>
// kernel: base_vae_forward.1
$region0: #{base_vae_forward.1}
  #allocation0 [shape = 'u32[]', space=smem, size = 0x4, offset = 0x4, fixed_abs, tag = 'smem constant byte address 0x4 - core index']
  #allocation1 [shape = 'u32[144,128]{1,0:T(1,128)}', space=vmem, size = 0x12000, scoped, tag = 'internal scratch']
  %s0 = inlined_call_operand.vmem [shape: bf16[2,1024], index: 0, kind: input, shape index: {}]
  %s1 = inlined_call_operand.vmem [shape: bf16[1024,128], index: 1, kind: input, shape index: {}]
  %s2 = inlined_call_operand.vmem [shape: f32[1,128], index: 2, kind: input, shape index: {}]
  %s3 = inlined_call_operand.vmem [shape: bf16[128,1024], index: 3, kind: input, shape index: {}]
  %s4 = inlined_call_operand.vmem [shape: f32[1,1024], index: 4, kind: input, shape index: {}]
  %s5 = inlined_call_operand.vmem [shape: f32[2,32], index: 5, kind: input, shape index: {}]
  %s6 = inlined_call_operand.vmem [shape: f32[2,1024], index: 6, kind: output, shape index: {0}]
  %s7 = inlined_call_operand.vmem [shape: f32[2,128], index: 7, kind: output, shape index: {1}]
  %8 = xla_tuple %s6, %s7
  %s9 = sld [smem:[#allocation0]]
  $region42: #{base_vae_forward.1} parent=0
    _
  %s11 = ssub.s32 1, %s9
  %s12 = scalar_select 0, %s11, %s9
  // Predicated region
  $region2: #{base_vae_forward.1} parent=0 // pred_check
    _
  $region3: #{base_vae_forward.1} parent=0 // pred_check_branch
    %14 = sbr.rel (0) target = $region5
  $region4: #{base_vae_forward.1} parent=0 // pred_region
    _
  $region5: #{base_vae_forward.1} parent=0 // pred_fallthru
    _
  // Predicated region
  $region6: #{base_vae_forward.1} parent=0 // pred_check
    _
  $region7: #{base_vae_forward.1} parent=0 // pred_check_branch
    %16 = sbr.rel (0) target = $region9
  $region8: #{base_vae_forward.1} parent=0 // pred_region
    _
  $region9: #{base_vae_forward.1} parent=0 // pred_fallthru
    _
  // Predicated region
  $region10: #{base_vae_forward.1} parent=0 // pred_check
    _
  $region11: #{base_vae_forward.1} parent=0 // pred_check_branch
    %18 = sbr.rel (0) target = $region13
  $region12: #{base_vae_forward.1} parent=0 // pred_region
    _
  $region13: #{base_vae_forward.1} parent=0 // pred_fallthru
    _
  // Predicated region
  $region14: #{base_vae_forward.1} parent=0 // pred_check
    _
  $region15: #{base_vae_forward.1} parent=0 // pred_check_branch
    %20 = sbr.rel (0) target = $region17
  $region16: #{base_vae_forward.1} parent=0 // pred_region
    _
  $region17: #{base_vae_forward.1} parent=0 // pred_fallthru
    _
  // Predicated region
  $region18: #{base_vae_forward.1} parent=0 // pred_check
    _
  $region19: #{base_vae_forward.1} parent=0 // pred_check_branch
    %22 = sbr.rel (0) target = $region21
  $region20: #{base_vae_forward.1} parent=0 // pred_region
    _
  $region21: #{base_vae_forward.1} parent=0 // pred_fallthru
    _
  // Predicated region
  $region22: #{base_vae_forward.1} parent=0 // pred_check
    _
  $region23: #{base_vae_forward.1} parent=0 // pred_check_branch
    %24 = sbr.rel (0) target = $region25
  $region24: #{base_vae_forward.1} parent=0 // pred_region
    _
  $region25: #{base_vae_forward.1} parent=0 // pred_fallthru
    _
  %v26 = vld [vmem:[%s0] sm:$0xff]
  %v27 = vld [vmem:[%s1] sm:$0xf]
  %v28 = vld [vmem:[%s1 + $0x4] sm:$0xf]
  %v29 = vld [vmem:[%s1 + $0x8] sm:$0xf]
  %v30 = vld [vmem:[%s1 + $0xc] sm:$0xf]
  %v31 = vld [vmem:[%s1 + $0x10] sm:$0xf]
  %v32 = vld [vmem:[%s1 + $0x14] sm:$0xf]
  %v33 = vld [vmem:[%s1 + $0x18] sm:$0xf]
  %v34 = vld [vmem:[%s1 + $0x1c] sm:$0xf]
  %v35 = vld [vmem:[%s1 + $0x20] sm:$0xf]
  %v36 = vld [vmem:[%s1 + $0x24] sm:$0xf]
  %v37 = vld [vmem:[%s1 + $0x28] sm:$0xf]
  %v38 = vld [vmem:[%s1 + $0x2c] sm:$0xf]
  %v39 = vld [vmem:[%s1 + $0x30] sm:$0xf]
  %v40 = vld [vmem:[%s1 + $0x34] sm:$0xf]
  %v41 = vld [vmem:[%s1 + $0x38] sm:$0xf]
  %v42 = vld [vmem:[%s1 + $0x3c] sm:$0xf]
  %v43 = vld [vmem:[%s1 + $0x40] sm:$0xf]
  %v44 = vld [vmem:[%s1 + $0x44] sm:$0xf]
  %v45 = vld [vmem:[%s1 + $0x48] sm:$0xf]
  %v46 = vld [vmem:[%s1 + $0x4c] sm:$0xf]
  %v47 = vld [vmem:[%s1 + $0x50] sm:$0xf]
  %v48 = vld [vmem:[%s1 + $0x54] sm:$0xf]
  %v49 = vld [vmem:[%s1 + $0x58] sm:$0xf]
  %v50 = vld [vmem:[%s1 + $0x5c] sm:$0xf]
  %v51 = vld [vmem:[%s1 + $0x60] sm:$0xf]
  %v52 = vld [vmem:[%s1 + $0x64] sm:$0xf]
  %v53 = vld [vmem:[%s1 + $0x68] sm:$0xf]
  %v54 = vld [vmem:[%s1 + $0x6c] sm:$0xf]
  %v55 = vld [vmem:[%s1 + $0x70] sm:$0xf]
  %v56 = vld [vmem:[%s1 + $0x74] sm:$0xf]
  %v57 = vld [vmem:[%s1 + $0x78] sm:$0xf]
  %v58 = vld [vmem:[%s1 + $0x7c] sm:$0xf]
  %v59 = vld [vmem:[%s1 + $0x80] sm:$0xf]
  %v60 = vld [vmem:[%s1 + $0x84] sm:$0xf]
  %v61 = vld [vmem:[%s1 + $0x88] sm:$0xf]
  %v62 = vld [vmem:[%s1 + $0x8c] sm:$0xf]
  %v63 = vld [vmem:[%s1 + $0x90] sm:$0xf]
  %v64 = vld [vmem:[%s1 + $0x94] sm:$0xf]
  %v65 = vld [vmem:[%s1 + $0x98] sm:$0xf]
  %v66 = vld [vmem:[%s1 + $0x9c] sm:$0xf]
  %v67 = vld [vmem:[%s1 + $0xa0] sm:$0xf]
  %v68 = vld [vmem:[%s1 + $0xa4] sm:$0xf]
  %v69 = vld [vmem:[%s1 + $0xa8] sm:$0xf]
  %v70 = vld [vmem:[%s1 + $0xac] sm:$0xf]
  %v71 = vld [vmem:[%s1 + $0xb0] sm:$0xf]
  %v72 = vld [vmem:[%s1 + $0xb4] sm:$0xf]
  %v73 = vld [vmem:[%s1 + $0xb8] sm:$0xf]
  %v74 = vld [vmem:[%s1 + $0xbc] sm:$0xf]
  %v75 = vld [vmem:[%s1 + $0xc0] sm:$0xf]
  %v76 = vld [vmem:[%s1 + $0xc4] sm:$0xf]
  %v77 = vld [vmem:[%s1 + $0xc8] sm:$0xf]
  %v78 = vld [vmem:[%s1 + $0xcc] sm:$0xf]
  %v79 = vld [vmem:[%s1 + $0xd0] sm:$0xf]
  %v80 = vld [vmem:[%s1 + $0xd4] sm:$0xf]
  %v81 = vld [vmem:[%s1 + $0xd8] sm:$0xf]
  %v82 = vld [vmem:[%s1 + $0xdc] sm:$0xf]
  %v83 = vld [vmem:[%s1 + $0xe0] sm:$0xf]
  %v84 = vld [vmem:[%s1 + $0xe4] sm:$0xf]
  %v85 = vld [vmem:[%s1 + $0xe8] sm:$0xf]
  %v86 = vld [vmem:[%s1 + $0xec] sm:$0xf]
  %v87 = vld [vmem:[%s1 + $0xf0] sm:$0xf]
  %v88 = vld [vmem:[%s1 + $0xf4] sm:$0xf]
  %v89 = vld [vmem:[%s1 + $0xf8] sm:$0xf]
  %v90 = vld [vmem:[%s1 + $0xfc] sm:$0xf]
  %v91 = vld [vmem:[%s1 + $0x100] sm:$0xf]
  %v92 = vld [vmem:[%s1 + $0x104] sm:$0xf]
  %v93 = vld [vmem:[%s1 + $0x108] sm:$0xf]
  %v94 = vld [vmem:[%s1 + $0x10c] sm:$0xf]
  %v95 = vld [vmem:[%s1 + $0x110] sm:$0xf]
  %v96 = vld [vmem:[%s1 + $0x114] sm:$0xf]
  %v97 = vld [vmem:[%s1 + $0x118] sm:$0xf]
  %v98 = vld [vmem:[%s1 + $0x11c] sm:$0xf]
  %v99 = vld [vmem:[%s1 + $0x120] sm:$0xf]
  %v100 = vld [vmem:[%s1 + $0x124] sm:$0xf]
  %v101 = vld [vmem:[%s1 + $0x128] sm:$0xf]
  %v102 = vld [vmem:[%s1 + $0x12c] sm:$0xf]
  %v103 = vld [vmem:[%s1 + $0x130] sm:$0xf]
  %v104 = vld [vmem:[%s1 + $0x134] sm:$0xf]
  %v105 = vld [vmem:[%s1 + $0x138] sm:$0xf]
  %v106 = vld [vmem:[%s1 + $0x13c] sm:$0xf]
  %v107 = vld [vmem:[%s1 + $0x140] sm:$0xf]
  %v108 = vld [vmem:[%s1 + $0x144] sm:$0xf]
  %v109 = vld [vmem:[%s1 + $0x148] sm:$0xf]
  %v110 = vld [vmem:[%s1 + $0x14c] sm:$0xf]
  %v111 = vld [vmem:[%s1 + $0x150] sm:$0xf]
  %v112 = vld [vmem:[%s1 + $0x154] sm:$0xf]
  %v113 = vld [vmem:[%s1 + $0x158] sm:$0xf]
  %v114 = vld [vmem:[%s1 + $0x15c] sm:$0xf]
  %v115 = vld [vmem:[%s1 + $0x160] sm:$0xf]
  %v116 = vld [vmem:[%s1 + $0x164] sm:$0xf]
  %v117 = vld [vmem:[%s1 + $0x168] sm:$0xf]
  %v118 = vld [vmem:[%s1 + $0x16c] sm:$0xf]
  %v119 = vld [vmem:[%s1 + $0x170] sm:$0xf]
  %v120 = vld [vmem:[%s1 + $0x174] sm:$0xf]
  %v121 = vld [vmem:[%s1 + $0x178] sm:$0xf]
  %v122 = vld [vmem:[%s1 + $0x17c] sm:$0xf]
  %v123 = vld [vmem:[%s1 + $0x180] sm:$0xf]
  %v124 = vld [vmem:[%s1 + $0x184] sm:$0xf]
  %v125 = vld [vmem:[%s1 + $0x188] sm:$0xf]
  %v126 = vld [vmem:[%s1 + $0x18c] sm:$0xf]
  %v127 = vld [vmem:[%s1 + $0x190] sm:$0xf]
  %v128 = vld [vmem:[%s1 + $0x194] sm:$0xf]
  %v129 = vld [vmem:[%s1 + $0x198] sm:$0xf]
  %v130 = vld [vmem:[%s1 + $0x19c] sm:$0xf]
  %v131 = vld [vmem:[%s1 + $0x1a0] sm:$0xf]
  %v132 = vld [vmem:[%s1 + $0x1a4] sm:$0xf]
  %v133 = vld [vmem:[%s1 + $0x1a8] sm:$0xf]
  %v134 = vld [vmem:[%s1 + $0x1ac] sm:$0xf]
  %v135 = vld [vmem:[%s1 + $0x1b0] sm:$0xf]
  %v136 = vld [vmem:[%s1 + $0x1b4] sm:$0xf]
  %v137 = vld [vmem:[%s1 + $0x1b8] sm:$0xf]
  %v138 = vld [vmem:[%s1 + $0x1bc] sm:$0xf]
  %v139 = vld [vmem:[%s1 + $0x1c0] sm:$0xf]
  %v140 = vld [vmem:[%s1 + $0x1c4] sm:$0xf]
  %v141 = vld [vmem:[%s1 + $0x1c8] sm:$0xf]
  %v142 = vld [vmem:[%s1 + $0x1cc] sm:$0xf]
  %v143 = vld [vmem:[%s1 + $0x1d0] sm:$0xf]
  %v144 = vld [vmem:[%s1 + $0x1d4] sm:$0xf]
  %v145 = vld [vmem:[%s1 + $0x1d8] sm:$0xf]
  %v146 = vld [vmem:[%s1 + $0x1dc] sm:$0xf]
  %v147 = vld [vmem:[%s1 + $0x1e0] sm:$0xf]
  %v148 = vld [vmem:[%s1 + $0x1e4] sm:$0xf]
  %v149 = vld [vmem:[%s1 + $0x1e8] sm:$0xf]
  %v150 = vld [vmem:[%s1 + $0x1ec] sm:$0xf]
  %v151 = vld [vmem:[%s1 + $0x1f0] sm:$0xf]
  %v152 = vld [vmem:[%s1 + $0x1f4] sm:$0xf]
  %v153 = vld [vmem:[%s1 + $0x1f8] sm:$0xf]
  %v154 = vld [vmem:[%s1 + $0x1fc] sm:$0xf]
  %v155 = vld [vmem:[%s2] sm:$0x1]
  %v157 = vlaneseq
  %v158 = vshrl.u32 %v157, 7
  %v159 = vsub.s32 0, %v158
  %v160 = vrot.slane %v155, %v159
  %v163 = vcombine.high %v26, %v26
  %v165 = vunpack.c.l.s4 1966171168
  %v166 = vunpack.c.0.s8 %v165
  %v167 = vlaneseq
  %v168 = vshrl.u32 %v167, 7
  %v169 = vsub.s32 %v166, %v168
  %v170 = vrot.slane %v26, %v169
  %v172 = vunpack.c.l.s4 1966171168
  %v173 = vunpack.c.0.s8 %v172
  %v174 = vlaneseq
  %v175 = vshrl.u32 %v174, 7
  %v176 = vsub.s32 %v173, %v175
  %v177 = vrot.slane %v163, %v176
  %v178 = vcombine.high %v170, %v170
  %v179 = vcombine.high %v177, %v177
  %v181 = vunpack.c.l.s4 1966171168
  %v182 = vunpack.c.0.s8 %v181
  %v183 = vlaneseq
  %v184 = vshrl.u32 %v183, 7
  %v185 = vsub.s32 %v182, %v184
  %v186 = vrot.slane %v170, %v185
  %v188 = vunpack.c.l.s4 1966171168
  %v189 = vunpack.c.0.s8 %v188
  %v190 = vlaneseq
  %v191 = vshrl.u32 %v190, 7
  %v192 = vsub.s32 %v189, %v191
  %v193 = vrot.slane %v177, %v192
  %v195 = vunpack.c.l.s4 1966171168
  %v196 = vunpack.c.0.s8 %v195
  %v197 = vlaneseq
  %v198 = vshrl.u32 %v197, 7
  %v199 = vsub.s32 %v196, %v198
  %v200 = vrot.slane %v178, %v199
  %v202 = vunpack.c.l.s4 1966171168
  %v203 = vunpack.c.0.s8 %v202
  %v204 = vlaneseq
  %v205 = vshrl.u32 %v204, 7
  %v206 = vsub.s32 %v203, %v205
  %v207 = vrot.slane %v179, %v206
  %v208 = vcombine.high %v186, %v186
  %v209 = vcombine.high %v193, %v193
  %v210 = vcombine.high %v200, %v200
  %v211 = vcombine.high %v207, %v207
  %v348 = vunpack.c.l.b16 %v27
  %v349 = vunpack.c.l.b16 %v28
  %v350 = vunpack.c.l.b16 %v29
  %v351 = vunpack.c.l.b16 %v30
  %v352 = vunpack.c.l.b16 %v31
  %v353 = vunpack.c.l.b16 %v32
  %v354 = vunpack.c.l.b16 %v33
  %v355 = vunpack.c.l.b16 %v34
  %v356 = vunpack.c.l.b16 %v35
  %v357 = vunpack.c.l.b16 %v36
  %v358 = vunpack.c.l.b16 %v37
  %v359 = vunpack.c.l.b16 %v38
  %v360 = vunpack.c.l.b16 %v39
  %v361 = vunpack.c.l.b16 %v40
  %v362 = vunpack.c.l.b16 %v41
  %v363 = vunpack.c.l.b16 %v42
  %v364 = vunpack.c.l.b16 %v43
  %v365 = vunpack.c.l.b16 %v44
  %v366 = vunpack.c.l.b16 %v45
  %v367 = vunpack.c.l.b16 %v46
  %v368 = vunpack.c.l.b16 %v47
  %v369 = vunpack.c.l.b16 %v48
  %v370 = vunpack.c.l.b16 %v49
  %v371 = vunpack.c.l.b16 %v50
  %v372 = vunpack.c.l.b16 %v51
  %v373 = vunpack.c.l.b16 %v52
  %v374 = vunpack.c.l.b16 %v53
  %v375 = vunpack.c.l.b16 %v54
  %v376 = vunpack.c.l.b16 %v55
  %v377 = vunpack.c.l.b16 %v56
  %v378 = vunpack.c.l.b16 %v57
  %v379 = vunpack.c.l.b16 %v58
  %v380 = vunpack.c.l.b16 %v59
  %v381 = vunpack.c.l.b16 %v60
  %v382 = vunpack.c.l.b16 %v61
  %v383 = vunpack.c.l.b16 %v62
  %v384 = vunpack.c.l.b16 %v63
  %v385 = vunpack.c.l.b16 %v64
  %v386 = vunpack.c.l.b16 %v65
  %v387 = vunpack.c.l.b16 %v66
  %v388 = vunpack.c.l.b16 %v67
  %v389 = vunpack.c.l.b16 %v68
  %v390 = vunpack.c.l.b16 %v69
  %v391 = vunpack.c.l.b16 %v70
  %v392 = vunpack.c.l.b16 %v71
  %v393 = vunpack.c.l.b16 %v72
  %v394 = vunpack.c.l.b16 %v73
  %v395 = vunpack.c.l.b16 %v74
  %v396 = vunpack.c.l.b16 %v75
  %v397 = vunpack.c.l.b16 %v76
  %v398 = vunpack.c.l.b16 %v77
  %v399 = vunpack.c.l.b16 %v78
  %v400 = vunpack.c.l.b16 %v79
  %v401 = vunpack.c.l.b16 %v80
  %v402 = vunpack.c.l.b16 %v81
  %v403 = vunpack.c.l.b16 %v82
  %v404 = vunpack.c.l.b16 %v83
  %v405 = vunpack.c.l.b16 %v84
  %v406 = vunpack.c.l.b16 %v85
  %v407 = vunpack.c.l.b16 %v86
  %v408 = vunpack.c.l.b16 %v87
  %v409 = vunpack.c.l.b16 %v88
  %v410 = vunpack.c.l.b16 %v89
  %v411 = vunpack.c.l.b16 %v90
  %v412 = vunpack.c.l.b16 %v91
  %v413 = vunpack.c.l.b16 %v92
  %v414 = vunpack.c.l.b16 %v93
  %v415 = vunpack.c.l.b16 %v94
  %v416 = vunpack.c.l.b16 %v95
  %v417 = vunpack.c.l.b16 %v96
  %v418 = vunpack.c.l.b16 %v97
  %v419 = vunpack.c.l.b16 %v98
  %v420 = vunpack.c.l.b16 %v99
  %v421 = vunpack.c.l.b16 %v100
  %v422 = vunpack.c.l.b16 %v101
  %v423 = vunpack.c.l.b16 %v102
  %v424 = vunpack.c.l.b16 %v103
  %v425 = vunpack.c.l.b16 %v104
  %v426 = vunpack.c.l.b16 %v105
  %v427 = vunpack.c.l.b16 %v106
  %v428 = vunpack.c.l.b16 %v107
  %v429 = vunpack.c.l.b16 %v108
  %v430 = vunpack.c.l.b16 %v109
  %v431 = vunpack.c.l.b16 %v110
  %v432 = vunpack.c.l.b16 %v111
  %v433 = vunpack.c.l.b16 %v112
  %v434 = vunpack.c.l.b16 %v113
  %v435 = vunpack.c.l.b16 %v114
  %v436 = vunpack.c.l.b16 %v115
  %v437 = vunpack.c.l.b16 %v116
  %v438 = vunpack.c.l.b16 %v117
  %v439 = vunpack.c.l.b16 %v118
  %v440 = vunpack.c.l.b16 %v119
  %v441 = vunpack.c.l.b16 %v120
  %v442 = vunpack.c.l.b16 %v121
  %v443 = vunpack.c.l.b16 %v122
  %v444 = vunpack.c.l.b16 %v123
  %v445 = vunpack.c.l.b16 %v124
  %v446 = vunpack.c.l.b16 %v125
  %v447 = vunpack.c.l.b16 %v126
  %v448 = vunpack.c.l.b16 %v127
  %v449 = vunpack.c.l.b16 %v128
  %v450 = vunpack.c.l.b16 %v129
  %v451 = vunpack.c.l.b16 %v130
  %v452 = vunpack.c.l.b16 %v131
  %v453 = vunpack.c.l.b16 %v132
  %v454 = vunpack.c.l.b16 %v133
  %v455 = vunpack.c.l.b16 %v134
  %v456 = vunpack.c.l.b16 %v135
  %v457 = vunpack.c.l.b16 %v136
  %v458 = vunpack.c.l.b16 %v137
  %v459 = vunpack.c.l.b16 %v138
  %v460 = vunpack.c.l.b16 %v139
  %v461 = vunpack.c.l.b16 %v140
  %v462 = vunpack.c.l.b16 %v141
  %v463 = vunpack.c.l.b16 %v142
  %v464 = vunpack.c.l.b16 %v143
  %v465 = vunpack.c.l.b16 %v144
  %v466 = vunpack.c.l.b16 %v145
  %v467 = vunpack.c.l.b16 %v146
  %v468 = vunpack.c.l.b16 %v147
  %v469 = vunpack.c.l.b16 %v148
  %v470 = vunpack.c.l.b16 %v149
  %v471 = vunpack.c.l.b16 %v150
  %v472 = vunpack.c.l.b16 %v151
  %v473 = vunpack.c.l.b16 %v152
  %v474 = vunpack.c.l.b16 %v153
  %v475 = vunpack.c.l.b16 %v154
  %v476 = vpack.c.b16 %v349, %v348
  %v477 = vpack.c.b16 %v351, %v350
  %v478 = vpack.c.b16 %v353, %v352
  %v479 = vpack.c.b16 %v355, %v354
  %v480 = vpack.c.b16 %v357, %v356
  %v481 = vpack.c.b16 %v359, %v358
  %v482 = vpack.c.b16 %v361, %v360
  %v483 = vpack.c.b16 %v363, %v362
  %v484 = vpack.c.b16 %v365, %v364
  %v485 = vpack.c.b16 %v367, %v366
  %v486 = vpack.c.b16 %v369, %v368
  %v487 = vpack.c.b16 %v371, %v370
  %v488 = vpack.c.b16 %v373, %v372
  %v489 = vpack.c.b16 %v375, %v374
  %v490 = vpack.c.b16 %v377, %v376
  %v491 = vpack.c.b16 %v379, %v378
  %v492 = vpack.c.b16 %v381, %v380
  %v493 = vpack.c.b16 %v383, %v382
  %v494 = vpack.c.b16 %v385, %v384
  %v495 = vpack.c.b16 %v387, %v386
  %v496 = vpack.c.b16 %v389, %v388
  %v497 = vpack.c.b16 %v391, %v390
  %v498 = vpack.c.b16 %v393, %v392
  %v499 = vpack.c.b16 %v395, %v394
  %v500 = vpack.c.b16 %v397, %v396
  %v501 = vpack.c.b16 %v399, %v398
  %v502 = vpack.c.b16 %v401, %v400
  %v503 = vpack.c.b16 %v403, %v402
  %v504 = vpack.c.b16 %v405, %v404
  %v505 = vpack.c.b16 %v407, %v406
  %v506 = vpack.c.b16 %v409, %v408
  %v507 = vpack.c.b16 %v411, %v410
  %v508 = vpack.c.b16 %v413, %v412
  %v509 = vpack.c.b16 %v415, %v414
  %v510 = vpack.c.b16 %v417, %v416
  %v511 = vpack.c.b16 %v419, %v418
  %v512 = vpack.c.b16 %v421, %v420
  %v513 = vpack.c.b16 %v423, %v422
  %v514 = vpack.c.b16 %v425, %v424
  %v515 = vpack.c.b16 %v427, %v426
  %v516 = vpack.c.b16 %v429, %v428
  %v517 = vpack.c.b16 %v431, %v430
  %v518 = vpack.c.b16 %v433, %v432
  %v519 = vpack.c.b16 %v435, %v434
  %v520 = vpack.c.b16 %v437, %v436
  %v521 = vpack.c.b16 %v439, %v438
  %v522 = vpack.c.b16 %v441, %v440
  %v523 = vpack.c.b16 %v443, %v442
  %v524 = vpack.c.b16 %v445, %v444
  %v525 = vpack.c.b16 %v447, %v446
  %v526 = vpack.c.b16 %v449, %v448
  %v527 = vpack.c.b16 %v451, %v450
  %v528 = vpack.c.b16 %v453, %v452
  %v529 = vpack.c.b16 %v455, %v454
  %v530 = vpack.c.b16 %v457, %v456
  %v531 = vpack.c.b16 %v459, %v458
  %v532 = vpack.c.b16 %v461, %v460
  %v533 = vpack.c.b16 %v463, %v462
  %v534 = vpack.c.b16 %v465, %v464
  %v535 = vpack.c.b16 %v467, %v466
  %v536 = vpack.c.b16 %v469, %v468
  %v537 = vpack.c.b16 %v471, %v470
  %v538 = vpack.c.b16 %v473, %v472
  %v539 = vpack.c.b16 %v475, %v474
  %604 = vmatprep.subr.bf16.mxu0 0
  %605 = vmatpush1.bf16.msra.mxu0 %v483
  %606 = vmatprep.subr.bf16.mxu0 0
  %607 = vmatpush1.bf16.msra.mxu0 %v482
  %608 = vmatprep.subr.bf16.mxu0 0
  %609 = vmatpush1.bf16.msra.mxu0 %v481
  %610 = vmatprep.subr.bf16.mxu0 0
  %611 = vmatpush1.bf16.msra.mxu0 %v480
  %612 = vmatprep.subr.bf16.mxu0 0
  %613 = vmatpush1.bf16.msra.mxu0 %v479
  %614 = vmatprep.subr.bf16.mxu0 0
  %615 = vmatpush1.bf16.msra.mxu0 %v478
  %616 = vmatprep.subr.bf16.mxu0 0
  %617 = vmatpush1.bf16.msra.mxu0 %v477
  %618 = vmatprep.subr.bf16.mxu0 0
  %619 = vmatpush1.bf16.msra.mxu0 %v476
  %620 = vmatprep.subr.bf16.mxu0 0
  %621 = vmatpush2.bf16.msra.mxu0 %v491
  %622 = vmatprep.subr.bf16.mxu0 0
  %623 = vmatpush2.bf16.msra.mxu0 %v490
  %624 = vmatprep.subr.bf16.mxu0 0
  %625 = vmatpush2.bf16.msra.mxu0 %v489
  %626 = vmatprep.subr.bf16.mxu0 0
  %627 = vmatpush2.bf16.msra.mxu0 %v488
  %628 = vmatprep.subr.bf16.mxu0 0
  %629 = vmatpush2.bf16.msra.mxu0 %v487
  %630 = vmatprep.subr.bf16.mxu0 0
  %631 = vmatpush2.bf16.msra.mxu0 %v486
  %632 = vmatprep.subr.bf16.mxu0 0
  %633 = vmatpush2.bf16.msra.mxu0 %v485
  %634 = vmatprep.subr.bf16.mxu0 0
  %635 = vmatpush2.bf16.msra.mxu0 %v484
  %636 = vmatprep.mubr.bf16.mxu0 %v200
  %637 = vmatmul.mubr.bf16.gmra.mxu0 %v186
  %v638 = vpop.f32.mrf.mxu0
  %v639 = vadd.f32 %v160, %v638
  %v640 = vpop.f32.mrf.mxu0
  %v641 = vpop.f32.mrf.mxu0
  %v642 = vpop.f32.mrf.mxu0
  %643 = vdwg.mxu0
  %644 = vmatprep.subr.bf16.mxu0 0
  %645 = vmatpush1.bf16.msra.mxu0 %v499
  %646 = vmatprep.subr.bf16.mxu0 0
  %647 = vmatpush1.bf16.msra.mxu0 %v498
  %648 = vmatprep.subr.bf16.mxu0 0
  %649 = vmatpush1.bf16.msra.mxu0 %v497
  %650 = vmatprep.subr.bf16.mxu0 0
  %651 = vmatpush1.bf16.msra.mxu0 %v496
  %652 = vmatprep.subr.bf16.mxu0 0
  %653 = vmatpush1.bf16.msra.mxu0 %v495
  %654 = vmatprep.subr.bf16.mxu0 0
  %655 = vmatpush1.bf16.msra.mxu0 %v494
  %656 = vmatprep.subr.bf16.mxu0 0
  %657 = vmatpush1.bf16.msra.mxu0 %v493
  %658 = vmatprep.subr.bf16.mxu0 0
  %659 = vmatpush1.bf16.msra.mxu0 %v492
  %660 = vmatprep.subr.bf16.mxu0 0
  %661 = vmatpush2.bf16.msra.mxu0 %v507
  %662 = vmatprep.subr.bf16.mxu0 0
  %663 = vmatpush2.bf16.msra.mxu0 %v506
  %664 = vmatprep.subr.bf16.mxu0 0
  %665 = vmatpush2.bf16.msra.mxu0 %v505
  %666 = vmatprep.subr.bf16.mxu0 0
  %667 = vmatpush2.bf16.msra.mxu0 %v504
  %668 = vmatprep.subr.bf16.mxu0 0
  %669 = vmatpush2.bf16.msra.mxu0 %v503
  %670 = vmatprep.subr.bf16.mxu0 0
  %671 = vmatpush2.bf16.msra.mxu0 %v502
  %672 = vmatprep.subr.bf16.mxu0 0
  %673 = vmatpush2.bf16.msra.mxu0 %v501
  %674 = vmatprep.subr.bf16.mxu0 0
  %675 = vmatpush2.bf16.msra.mxu0 %v500
  %676 = vmatprep.mubr.bf16.mxu0 %v210
  %677 = vmatmul.mubr.bf16.gmra.mxu0 %v208
  %v678 = vpop.f32.mrf.mxu0
  %v679 = vadd.f32 %v639, %v678
  %v680 = vpop.f32.mrf.mxu0
  %v681 = vpop.f32.mrf.mxu0
  %v682 = vpop.f32.mrf.mxu0
  %683 = vdwg.mxu0
  %684 = vmatprep.subr.bf16.mxu0 0
  %685 = vmatpush1.bf16.msra.mxu0 %v515
  %686 = vmatprep.subr.bf16.mxu0 0
  %687 = vmatpush1.bf16.msra.mxu0 %v514
  %688 = vmatprep.subr.bf16.mxu0 0
  %689 = vmatpush1.bf16.msra.mxu0 %v513
  %690 = vmatprep.subr.bf16.mxu0 0
  %691 = vmatpush1.bf16.msra.mxu0 %v512
  %692 = vmatprep.subr.bf16.mxu0 0
  %693 = vmatpush1.bf16.msra.mxu0 %v511
  %694 = vmatprep.subr.bf16.mxu0 0
  %695 = vmatpush1.bf16.msra.mxu0 %v510
  %696 = vmatprep.subr.bf16.mxu0 0
  %697 = vmatpush1.bf16.msra.mxu0 %v509
  %698 = vmatprep.subr.bf16.mxu0 0
  %699 = vmatpush1.bf16.msra.mxu0 %v508
  %700 = vmatprep.subr.bf16.mxu0 0
  %701 = vmatpush2.bf16.msra.mxu0 %v523
  %702 = vmatprep.subr.bf16.mxu0 0
  %703 = vmatpush2.bf16.msra.mxu0 %v522
  %704 = vmatprep.subr.bf16.mxu0 0
  %705 = vmatpush2.bf16.msra.mxu0 %v521
  %706 = vmatprep.subr.bf16.mxu0 0
  %707 = vmatpush2.bf16.msra.mxu0 %v520
  %708 = vmatprep.subr.bf16.mxu0 0
  %709 = vmatpush2.bf16.msra.mxu0 %v519
  %710 = vmatprep.subr.bf16.mxu0 0
  %711 = vmatpush2.bf16.msra.mxu0 %v518
  %712 = vmatprep.subr.bf16.mxu0 0
  %713 = vmatpush2.bf16.msra.mxu0 %v517
  %714 = vmatprep.subr.bf16.mxu0 0
  %715 = vmatpush2.bf16.msra.mxu0 %v516
  %716 = vmatprep.mubr.bf16.mxu0 %v207
  %717 = vmatmul.mubr.bf16.gmra.mxu0 %v193
  %v718 = vpop.f32.mrf.mxu0
  %v719 = vadd.f32 %v679, %v718
  %v720 = vpop.f32.mrf.mxu0
  %v721 = vpop.f32.mrf.mxu0
  %v722 = vpop.f32.mrf.mxu0
  %723 = vdwg.mxu0
  %724 = vmatprep.subr.bf16.mxu0 0
  %725 = vmatpush1.bf16.msra.mxu0 %v531
  %726 = vmatprep.subr.bf16.mxu0 0
  %727 = vmatpush1.bf16.msra.mxu0 %v530
  %728 = vmatprep.subr.bf16.mxu0 0
  %729 = vmatpush1.bf16.msra.mxu0 %v529
  %730 = vmatprep.subr.bf16.mxu0 0
  %731 = vmatpush1.bf16.msra.mxu0 %v528
  %732 = vmatprep.subr.bf16.mxu0 0
  %733 = vmatpush1.bf16.msra.mxu0 %v527
  %734 = vmatprep.subr.bf16.mxu0 0
  %735 = vmatpush1.bf16.msra.mxu0 %v526
  %736 = vmatprep.subr.bf16.mxu0 0
  %737 = vmatpush1.bf16.msra.mxu0 %v525
  %738 = vmatprep.subr.bf16.mxu0 0
  %739 = vmatpush1.bf16.msra.mxu0 %v524
  %740 = vmatprep.subr.bf16.mxu0 0
  %741 = vmatpush2.bf16.msra.mxu0 %v539
  %742 = vmatprep.subr.bf16.mxu0 0
  %743 = vmatpush2.bf16.msra.mxu0 %v538
  %744 = vmatprep.subr.bf16.mxu0 0
  %745 = vmatpush2.bf16.msra.mxu0 %v537
  %746 = vmatprep.subr.bf16.mxu0 0
  %747 = vmatpush2.bf16.msra.mxu0 %v536
  %748 = vmatprep.subr.bf16.mxu0 0
  %749 = vmatpush2.bf16.msra.mxu0 %v535
  %750 = vmatprep.subr.bf16.mxu0 0
  %751 = vmatpush2.bf16.msra.mxu0 %v534
  %752 = vmatprep.subr.bf16.mxu0 0
  %753 = vmatpush2.bf16.msra.mxu0 %v533
  %754 = vmatprep.subr.bf16.mxu0 0
  %755 = vmatpush2.bf16.msra.mxu0 %v532
  %756 = vmatprep.mubr.bf16.mxu0 %v211
  %757 = vmatmul.mubr.bf16.gmra.mxu0 %v209
  %v758 = vpop.f32.mrf.mxu0
  %v759 = vadd.f32 %v719, %v758
  %v760 = vpop.f32.mrf.mxu0
  %v761 = vpop.f32.mrf.mxu0
  %v762 = vpop.f32.mrf.mxu0
  %763 = vdwg.mxu0
  %v764 = vmul.f32 %v759, 0.5
  %v765 = vmul.f32 %v764, 1.442695
  %v766 = vpow.pop %v765
  %v767 = vld [vmem:[%s5] sm:$0x3]
  %769 = vrot.lane.b32.xlu0 %v766, 96
  %v770 = vpop.permute.xlu0 %769
  %v772 = vmul.f32 %v767, %v770
  %v773 = vadd.f32 %v759, %v772
  %775 = vrot.lane.b32.xlu0 %v773, 64
  %v776 = vpop.permute.xlu0 %775
  %vm778 = vcmask 523264
  %v779 = vsel %vm778, %v759, %v776
  %vm780 = vcmask 785408
  %v781 = vsel %vm780, %v779, 0.0
  %v782 = vpack.c.bf16 %v781, %v781
  %v783 = vld [vmem:[%s3] sm:$0xff]
  %v784 = vld [vmem:[%s3 + $0x8] sm:$0xff]
  %v785 = vld [vmem:[%s3 + $0x10] sm:$0xff]
  %v786 = vld [vmem:[%s3 + $0x18] sm:$0xff]
  %v787 = vld [vmem:[%s3 + $0x20] sm:$0xff]
  %v788 = vld [vmem:[%s3 + $0x28] sm:$0xff]
  %v789 = vld [vmem:[%s3 + $0x30] sm:$0xff]
  %v790 = vld [vmem:[%s3 + $0x38] sm:$0xff]
  %v791 = vld [vmem:[%s3 + $0x40] sm:$0xff]
  %v792 = vld [vmem:[%s3 + $0x48] sm:$0xff]
  %v793 = vld [vmem:[%s3 + $0x50] sm:$0xff]
  %v794 = vld [vmem:[%s3 + $0x58] sm:$0xff]
  %v795 = vld [vmem:[%s3 + $0x60] sm:$0xff]
  %v796 = vld [vmem:[%s3 + $0x68] sm:$0xff]
  %v797 = vld [vmem:[%s3 + $0x70] sm:$0xff]
  %v798 = vld [vmem:[%s3 + $0x78] sm:$0xff]
  %v799 = vld [vmem:[%s3 + $0x80] sm:$0xff]
  %v800 = vld [vmem:[%s3 + $0x88] sm:$0xff]
  %v801 = vld [vmem:[%s3 + $0x90] sm:$0xff]
  %v802 = vld [vmem:[%s3 + $0x98] sm:$0xff]
  %v803 = vld [vmem:[%s3 + $0xa0] sm:$0xff]
  %v804 = vld [vmem:[%s3 + $0xa8] sm:$0xff]
  %v805 = vld [vmem:[%s3 + $0xb0] sm:$0xff]
  %v806 = vld [vmem:[%s3 + $0xb8] sm:$0xff]
  %v807 = vld [vmem:[%s3 + $0xc0] sm:$0xff]
  %v808 = vld [vmem:[%s3 + $0xc8] sm:$0xff]
  %v809 = vld [vmem:[%s3 + $0xd0] sm:$0xff]
  %v810 = vld [vmem:[%s3 + $0xd8] sm:$0xff]
  %v811 = vld [vmem:[%s3 + $0xe0] sm:$0xff]
  %v812 = vld [vmem:[%s3 + $0xe8] sm:$0xff]
  %v813 = vld [vmem:[%s3 + $0xf0] sm:$0xff]
  %v814 = vld [vmem:[%s3 + $0xf8] sm:$0xff]
  %v815 = vld [vmem:[%s3 + $0x100] sm:$0xff]
  %v816 = vld [vmem:[%s3 + $0x108] sm:$0xff]
  %v817 = vld [vmem:[%s3 + $0x110] sm:$0xff]
  %v818 = vld [vmem:[%s3 + $0x118] sm:$0xff]
  %v819 = vld [vmem:[%s3 + $0x120] sm:$0xff]
  %v820 = vld [vmem:[%s3 + $0x128] sm:$0xff]
  %v821 = vld [vmem:[%s3 + $0x130] sm:$0xff]
  %v822 = vld [vmem:[%s3 + $0x138] sm:$0xff]
  %v823 = vld [vmem:[%s3 + $0x140] sm:$0xff]
  %v824 = vld [vmem:[%s3 + $0x148] sm:$0xff]
  %v825 = vld [vmem:[%s3 + $0x150] sm:$0xff]
  %v826 = vld [vmem:[%s3 + $0x158] sm:$0xff]
  %v827 = vld [vmem:[%s3 + $0x160] sm:$0xff]
  %v828 = vld [vmem:[%s3 + $0x168] sm:$0xff]
  %v829 = vld [vmem:[%s3 + $0x170] sm:$0xff]
  %v830 = vld [vmem:[%s3 + $0x178] sm:$0xff]
  %v831 = vld [vmem:[%s3 + $0x180] sm:$0xff]
  %v832 = vld [vmem:[%s3 + $0x188] sm:$0xff]
  %v833 = vld [vmem:[%s3 + $0x190] sm:$0xff]
  %v834 = vld [vmem:[%s3 + $0x198] sm:$0xff]
  %v835 = vld [vmem:[%s3 + $0x1a0] sm:$0xff]
  %v836 = vld [vmem:[%s3 + $0x1a8] sm:$0xff]
  %v837 = vld [vmem:[%s3 + $0x1b0] sm:$0xff]
  %v838 = vld [vmem:[%s3 + $0x1b8] sm:$0xff]
  %v839 = vld [vmem:[%s3 + $0x1c0] sm:$0xff]
  %v840 = vld [vmem:[%s3 + $0x1c8] sm:$0xff]
  %v841 = vld [vmem:[%s3 + $0x1d0] sm:$0xff]
  %v842 = vld [vmem:[%s3 + $0x1d8] sm:$0xff]
  %v843 = vld [vmem:[%s3 + $0x1e0] sm:$0xff]
  %v844 = vld [vmem:[%s3 + $0x1e8] sm:$0xff]
  %v845 = vld [vmem:[%s3 + $0x1f0] sm:$0xff]
  %v846 = vld [vmem:[%s3 + $0x1f8] sm:$0xff]
  %v847 = vld [vmem:[%s4] sm:$0xff]
  %v849 = vlaneseq
  %v850 = vshrl.u32 %v849, 7
  %v851 = vsub.s32 0, %v850
  %v852 = vrot.slane %v847, %v851
  %v853 = vlaneseq
  %v854 = vshrl.u32 %v853, 7
  %v855 = vsub.s32 1, %v854
  %v856 = vrot.slane %v847, %v855
  %v857 = vlaneseq
  %v858 = vshrl.u32 %v857, 7
  %v859 = vsub.s32 2, %v858
  %v860 = vrot.slane %v847, %v859
  %v861 = vlaneseq
  %v862 = vshrl.u32 %v861, 7
  %v863 = vsub.s32 3, %v862
  %v864 = vrot.slane %v847, %v863
  %v865 = vlaneseq
  %v866 = vshrl.u32 %v865, 7
  %v867 = vsub.s32 4, %v866
  %v868 = vrot.slane %v847, %v867
  %v869 = vlaneseq
  %v870 = vshrl.u32 %v869, 7
  %v871 = vsub.s32 5, %v870
  %v872 = vrot.slane %v847, %v871
  %v873 = vlaneseq
  %v874 = vshrl.u32 %v873, 7
  %v875 = vsub.s32 6, %v874
  %v876 = vrot.slane %v847, %v875
  %v877 = vlaneseq
  %v878 = vshrl.u32 %v877, 7
  %v879 = vsub.s32 7, %v878
  %v880 = vrot.slane %v847, %v879
  %v953 = vunpack.c.l.b16 %v783
  %v954 = vunpack.c.h.b16 %v783
  %v955 = vunpack.c.l.b16 %v784
  %v956 = vunpack.c.h.b16 %v784
  %v957 = vunpack.c.l.b16 %v785
  %v958 = vunpack.c.h.b16 %v785
  %v959 = vunpack.c.l.b16 %v786
  %v960 = vunpack.c.h.b16 %v786
  %v961 = vunpack.c.l.b16 %v787
  %v962 = vunpack.c.h.b16 %v787
  %v963 = vunpack.c.l.b16 %v788
  %v964 = vunpack.c.h.b16 %v788
  %v965 = vunpack.c.l.b16 %v789
  %v966 = vunpack.c.h.b16 %v789
  %v967 = vunpack.c.l.b16 %v790
  %v968 = vunpack.c.h.b16 %v790
  %v969 = vunpack.c.l.b16 %v791
  %v970 = vunpack.c.h.b16 %v791
  %v971 = vunpack.c.l.b16 %v792
  %v972 = vunpack.c.h.b16 %v792
  %v973 = vunpack.c.l.b16 %v793
  %v974 = vunpack.c.h.b16 %v793
  %v975 = vunpack.c.l.b16 %v794
  %v976 = vunpack.c.h.b16 %v794
  %v977 = vunpack.c.l.b16 %v795
  %v978 = vunpack.c.h.b16 %v795
  %v979 = vunpack.c.l.b16 %v796
  %v980 = vunpack.c.h.b16 %v796
  %v981 = vunpack.c.l.b16 %v797
  %v982 = vunpack.c.h.b16 %v797
  %v983 = vunpack.c.l.b16 %v798
  %v984 = vunpack.c.h.b16 %v798
  %v985 = vunpack.c.l.b16 %v799
  %v986 = vunpack.c.h.b16 %v799
  %v987 = vunpack.c.l.b16 %v800
  %v988 = vunpack.c.h.b16 %v800
  %v989 = vunpack.c.l.b16 %v801
  %v990 = vunpack.c.h.b16 %v801
  %v991 = vunpack.c.l.b16 %v802
  %v992 = vunpack.c.h.b16 %v802
  %v993 = vunpack.c.l.b16 %v803
  %v994 = vunpack.c.h.b16 %v803
  %v995 = vunpack.c.l.b16 %v804
  %v996 = vunpack.c.h.b16 %v804
  %v997 = vunpack.c.l.b16 %v805
  %v998 = vunpack.c.h.b16 %v805
  %v999 = vunpack.c.l.b16 %v806
  %v1000 = vunpack.c.h.b16 %v806
  %v1001 = vunpack.c.l.b16 %v807
  %v1002 = vunpack.c.h.b16 %v807
  %v1003 = vunpack.c.l.b16 %v808
  %v1004 = vunpack.c.h.b16 %v808
  %v1005 = vunpack.c.l.b16 %v809
  %v1006 = vunpack.c.h.b16 %v809
  %v1007 = vunpack.c.l.b16 %v810
  %v1008 = vunpack.c.h.b16 %v810
  %v1009 = vunpack.c.l.b16 %v811
  %v1010 = vunpack.c.h.b16 %v811
  %v1011 = vunpack.c.l.b16 %v812
  %v1012 = vunpack.c.h.b16 %v812
  %v1013 = vunpack.c.l.b16 %v813
  %v1014 = vunpack.c.h.b16 %v813
  %v1015 = vunpack.c.l.b16 %v814
  %v1016 = vunpack.c.h.b16 %v814
  %v1017 = vunpack.c.l.b16 %v815
  %v1018 = vunpack.c.h.b16 %v815
  %v1019 = vunpack.c.l.b16 %v816
  %v1020 = vunpack.c.h.b16 %v816
  %v1021 = vunpack.c.l.b16 %v817
  %v1022 = vunpack.c.h.b16 %v817
  %v1023 = vunpack.c.l.b16 %v818
  %v1024 = vunpack.c.h.b16 %v818
  %v1025 = vunpack.c.l.b16 %v819
  %v1026 = vunpack.c.h.b16 %v819
  %v1027 = vunpack.c.l.b16 %v820
  %v1028 = vunpack.c.h.b16 %v820
  %v1029 = vunpack.c.l.b16 %v821
  %v1030 = vunpack.c.h.b16 %v821
  %v1031 = vunpack.c.l.b16 %v822
  %v1032 = vunpack.c.h.b16 %v822
  %v1033 = vunpack.c.l.b16 %v823
  %v1034 = vunpack.c.h.b16 %v823
  %v1035 = vunpack.c.l.b16 %v824
  %v1036 = vunpack.c.h.b16 %v824
  %v1037 = vunpack.c.l.b16 %v825
  %v1038 = vunpack.c.h.b16 %v825
  %v1039 = vunpack.c.l.b16 %v826
  %v1040 = vunpack.c.h.b16 %v826
  %v1041 = vunpack.c.l.b16 %v827
  %v1042 = vunpack.c.h.b16 %v827
  %v1043 = vunpack.c.l.b16 %v828
  %v1044 = vunpack.c.h.b16 %v828
  %v1045 = vunpack.c.l.b16 %v829
  %v1046 = vunpack.c.h.b16 %v829
  %v1047 = vunpack.c.l.b16 %v830
  %v1048 = vunpack.c.h.b16 %v830
  %v1049 = vunpack.c.l.b16 %v831
  %v1050 = vunpack.c.h.b16 %v831
  %v1051 = vunpack.c.l.b16 %v832
  %v1052 = vunpack.c.h.b16 %v832
  %v1053 = vunpack.c.l.b16 %v833
  %v1054 = vunpack.c.h.b16 %v833
  %v1055 = vunpack.c.l.b16 %v834
  %v1056 = vunpack.c.h.b16 %v834
  %v1057 = vunpack.c.l.b16 %v835
  %v1058 = vunpack.c.h.b16 %v835
  %v1059 = vunpack.c.l.b16 %v836
  %v1060 = vunpack.c.h.b16 %v836
  %v1061 = vunpack.c.l.b16 %v837
  %v1062 = vunpack.c.h.b16 %v837
  %v1063 = vunpack.c.l.b16 %v838
  %v1064 = vunpack.c.h.b16 %v838
  %v1065 = vunpack.c.l.b16 %v839
  %v1066 = vunpack.c.h.b16 %v839
  %v1067 = vunpack.c.l.b16 %v840
  %v1068 = vunpack.c.h.b16 %v840
  %v1069 = vunpack.c.l.b16 %v841
  %v1070 = vunpack.c.h.b16 %v841
  %v1071 = vunpack.c.l.b16 %v842
  %v1072 = vunpack.c.h.b16 %v842
  %v1073 = vunpack.c.l.b16 %v843
  %v1074 = vunpack.c.h.b16 %v843
  %v1075 = vunpack.c.l.b16 %v844
  %v1076 = vunpack.c.h.b16 %v844
  %v1077 = vunpack.c.l.b16 %v845
  %v1078 = vunpack.c.h.b16 %v845
  %v1079 = vunpack.c.l.b16 %v846
  %v1080 = vunpack.c.h.b16 %v846
  %v1081 = vpack.c.b16 %v961, %v953
  %v1082 = vpack.c.b16 %v962, %v954
  %v1083 = vpack.c.b16 %v963, %v955
  %v1084 = vpack.c.b16 %v964, %v956
  %v1085 = vpack.c.b16 %v965, %v957
  %v1086 = vpack.c.b16 %v966, %v958
  %v1087 = vpack.c.b16 %v967, %v959
  %v1088 = vpack.c.b16 %v968, %v960
  %v1089 = vpack.c.b16 %v977, %v969
  %v1090 = vpack.c.b16 %v978, %v970
  %v1091 = vpack.c.b16 %v979, %v971
  %v1092 = vpack.c.b16 %v980, %v972
  %v1093 = vpack.c.b16 %v981, %v973
  %v1094 = vpack.c.b16 %v982, %v974
  %v1095 = vpack.c.b16 %v983, %v975
  %v1096 = vpack.c.b16 %v984, %v976
  %v1097 = vpack.c.b16 %v993, %v985
  %v1098 = vpack.c.b16 %v994, %v986
  %v1099 = vpack.c.b16 %v995, %v987
  %v1100 = vpack.c.b16 %v996, %v988
  %v1101 = vpack.c.b16 %v997, %v989
  %v1102 = vpack.c.b16 %v998, %v990
  %v1103 = vpack.c.b16 %v999, %v991
  %v1104 = vpack.c.b16 %v1000, %v992
  %v1105 = vpack.c.b16 %v1009, %v1001
  %v1106 = vpack.c.b16 %v1010, %v1002
  %v1107 = vpack.c.b16 %v1011, %v1003
  %v1108 = vpack.c.b16 %v1012, %v1004
  %v1109 = vpack.c.b16 %v1013, %v1005
  %v1110 = vpack.c.b16 %v1014, %v1006
  %v1111 = vpack.c.b16 %v1015, %v1007
  %v1112 = vpack.c.b16 %v1016, %v1008
  %v1113 = vpack.c.b16 %v1025, %v1017
  %v1114 = vpack.c.b16 %v1026, %v1018
  %v1115 = vpack.c.b16 %v1027, %v1019
  %v1116 = vpack.c.b16 %v1028, %v1020
  %v1117 = vpack.c.b16 %v1029, %v1021
  %v1118 = vpack.c.b16 %v1030, %v1022
  %v1119 = vpack.c.b16 %v1031, %v1023
  %v1120 = vpack.c.b16 %v1032, %v1024
  %v1121 = vpack.c.b16 %v1041, %v1033
  %v1122 = vpack.c.b16 %v1042, %v1034
  %v1123 = vpack.c.b16 %v1043, %v1035
  %v1124 = vpack.c.b16 %v1044, %v1036
  %v1125 = vpack.c.b16 %v1045, %v1037
  %v1126 = vpack.c.b16 %v1046, %v1038
  %v1127 = vpack.c.b16 %v1047, %v1039
  %v1128 = vpack.c.b16 %v1048, %v1040
  %v1129 = vpack.c.b16 %v1057, %v1049
  %v1130 = vpack.c.b16 %v1058, %v1050
  %v1131 = vpack.c.b16 %v1059, %v1051
  %v1132 = vpack.c.b16 %v1060, %v1052
  %v1133 = vpack.c.b16 %v1061, %v1053
  %v1134 = vpack.c.b16 %v1062, %v1054
  %v1135 = vpack.c.b16 %v1063, %v1055
  %v1136 = vpack.c.b16 %v1064, %v1056
  %v1137 = vpack.c.b16 %v1073, %v1065
  %v1138 = vpack.c.b16 %v1074, %v1066
  %v1139 = vpack.c.b16 %v1075, %v1067
  %v1140 = vpack.c.b16 %v1076, %v1068
  %v1141 = vpack.c.b16 %v1077, %v1069
  %v1142 = vpack.c.b16 %v1078, %v1070
  %v1143 = vpack.c.b16 %v1079, %v1071
  %v1144 = vpack.c.b16 %v1080, %v1072
  %1209 = vmatprep.subr.bf16.mxu0 %v1138
  %1210 = vmatpush1.bf16.msra.mxu0 %v1137
  %1211 = vmatprep.subr.bf16.mxu0 %v1130
  %1212 = vmatpush1.bf16.msra.mxu0 %v1129
  %1213 = vmatprep.subr.bf16.mxu0 %v1122
  %1214 = vmatpush1.bf16.msra.mxu0 %v1121
  %1215 = vmatprep.subr.bf16.mxu0 %v1114
  %1216 = vmatpush1.bf16.msra.mxu0 %v1113
  %1217 = vmatprep.subr.bf16.mxu0 %v1106
  %1218 = vmatpush1.bf16.msra.mxu0 %v1105
  %1219 = vmatprep.subr.bf16.mxu0 %v1098
  %1220 = vmatpush1.bf16.msra.mxu0 %v1097
  %1221 = vmatprep.subr.bf16.mxu0 %v1090
  %1222 = vmatpush1.bf16.msra.mxu0 %v1089
  %1223 = vmatprep.subr.bf16.mxu0 %v1082
  %1224 = vmatpush1.bf16.msra.mxu0 %v1081
  %1225 = vmatprep.subr.bf16.mxu0 0
  %1226 = vmatpush2.bf16.msra.mxu0 0
  %1227 = vmatprep.subr.bf16.mxu0 0
  %1228 = vmatpush2.bf16.msra.mxu0 0
  %1229 = vmatprep.subr.bf16.mxu0 0
  %1230 = vmatpush2.bf16.msra.mxu0 0
  %1231 = vmatprep.subr.bf16.mxu0 0
  %1232 = vmatpush2.bf16.msra.mxu0 0
  %1233 = vmatprep.subr.bf16.mxu0 0
  %1234 = vmatpush2.bf16.msra.mxu0 0
  %1235 = vmatprep.subr.bf16.mxu0 0
  %1236 = vmatpush2.bf16.msra.mxu0 0
  %1237 = vmatprep.subr.bf16.mxu0 0
  %1238 = vmatpush2.bf16.msra.mxu0 0
  %1239 = vmatprep.subr.bf16.mxu0 0
  %1240 = vmatpush2.bf16.msra.mxu0 0
  %1241 = vmatprep.mubr.bf16.mxu0 0
  %1242 = vmatmul.mubr.bf16.gmra.mxu0 %v782
  %v1243 = vpop.f32.mrf.mxu0
  %v1244 = vadd.f32 %v852, %v1243
  %v1245 = vpop.f32.mrf.mxu0
  %v1246 = vadd.f32 %v856, %v1245
  %v1247 = vpop.f32.mrf.mxu0
  %v1248 = vpop.f32.mrf.mxu0
  %1249 = vdwg.mxu0
  %1250 = vmatprep.subr.bf16.mxu0 %v1140
  %1251 = vmatpush1.bf16.msra.mxu0 %v1139
  %1252 = vmatprep.subr.bf16.mxu0 %v1132
  %1253 = vmatpush1.bf16.msra.mxu0 %v1131
  %1254 = vmatprep.subr.bf16.mxu0 %v1124
  %1255 = vmatpush1.bf16.msra.mxu0 %v1123
  %1256 = vmatprep.subr.bf16.mxu0 %v1116
  %1257 = vmatpush1.bf16.msra.mxu0 %v1115
  %1258 = vmatprep.subr.bf16.mxu0 %v1108
  %1259 = vmatpush1.bf16.msra.mxu0 %v1107
  %1260 = vmatprep.subr.bf16.mxu0 %v1100
  %1261 = vmatpush1.bf16.msra.mxu0 %v1099
  %1262 = vmatprep.subr.bf16.mxu0 %v1092
  %1263 = vmatpush1.bf16.msra.mxu0 %v1091
  %1264 = vmatprep.subr.bf16.mxu0 %v1084
  %1265 = vmatpush1.bf16.msra.mxu0 %v1083
  %1266 = vmatprep.subr.bf16.mxu0 0
  %1267 = vmatpush2.bf16.msra.mxu0 0
  %1268 = vmatprep.subr.bf16.mxu0 0
  %1269 = vmatpush2.bf16.msra.mxu0 0
  %1270 = vmatprep.subr.bf16.mxu0 0
  %1271 = vmatpush2.bf16.msra.mxu0 0
  %1272 = vmatprep.subr.bf16.mxu0 0
  %1273 = vmatpush2.bf16.msra.mxu0 0
  %1274 = vmatprep.subr.bf16.mxu0 0
  %1275 = vmatpush2.bf16.msra.mxu0 0
  %1276 = vmatprep.subr.bf16.mxu0 0
  %1277 = vmatpush2.bf16.msra.mxu0 0
  %1278 = vmatprep.subr.bf16.mxu0 0
  %1279 = vmatpush2.bf16.msra.mxu0 0
  %1280 = vmatprep.subr.bf16.mxu0 0
  %1281 = vmatpush2.bf16.msra.mxu0 0
  %1282 = vmatprep.mubr.bf16.mxu0 0
  %1283 = vmatmul.mubr.bf16.gmra.mxu0 %v782
  %v1284 = vpop.f32.mrf.mxu0
  %v1285 = vadd.f32 %v860, %v1284
  %v1286 = vpop.f32.mrf.mxu0
  %v1287 = vadd.f32 %v864, %v1286
  %v1288 = vpop.f32.mrf.mxu0
  %v1289 = vpop.f32.mrf.mxu0
  %1290 = vdwg.mxu0
  %1291 = vmatprep.subr.bf16.mxu0 %v1142
  %1292 = vmatpush1.bf16.msra.mxu0 %v1141
  %1293 = vmatprep.subr.bf16.mxu0 %v1134
  %1294 = vmatpush1.bf16.msra.mxu0 %v1133
  %1295 = vmatprep.subr.bf16.mxu0 %v1126
  %1296 = vmatpush1.bf16.msra.mxu0 %v1125
  %1297 = vmatprep.subr.bf16.mxu0 %v1118
  %1298 = vmatpush1.bf16.msra.mxu0 %v1117
  %1299 = vmatprep.subr.bf16.mxu0 %v1110
  %1300 = vmatpush1.bf16.msra.mxu0 %v1109
  %1301 = vmatprep.subr.bf16.mxu0 %v1102
  %1302 = vmatpush1.bf16.msra.mxu0 %v1101
  %1303 = vmatprep.subr.bf16.mxu0 %v1094
  %1304 = vmatpush1.bf16.msra.mxu0 %v1093
  %1305 = vmatprep.subr.bf16.mxu0 %v1086
  %1306 = vmatpush1.bf16.msra.mxu0 %v1085
  %1307 = vmatprep.subr.bf16.mxu0 0
  %1308 = vmatpush2.bf16.msra.mxu0 0
  %1309 = vmatprep.subr.bf16.mxu0 0
  %1310 = vmatpush2.bf16.msra.mxu0 0
  %1311 = vmatprep.subr.bf16.mxu0 0
  %1312 = vmatpush2.bf16.msra.mxu0 0
  %1313 = vmatprep.subr.bf16.mxu0 0
  %1314 = vmatpush2.bf16.msra.mxu0 0
  %1315 = vmatprep.subr.bf16.mxu0 0
  %1316 = vmatpush2.bf16.msra.mxu0 0
  %1317 = vmatprep.subr.bf16.mxu0 0
  %1318 = vmatpush2.bf16.msra.mxu0 0
  %1319 = vmatprep.subr.bf16.mxu0 0
  %1320 = vmatpush2.bf16.msra.mxu0 0
  %1321 = vmatprep.subr.bf16.mxu0 0
  %1322 = vmatpush2.bf16.msra.mxu0 0
  %1323 = vmatprep.mubr.bf16.mxu0 0
  %1324 = vmatmul.mubr.bf16.gmra.mxu0 %v782
  %v1325 = vpop.f32.mrf.mxu0
  %v1326 = vadd.f32 %v868, %v1325
  %v1327 = vpop.f32.mrf.mxu0
  %v1328 = vadd.f32 %v872, %v1327
  %v1329 = vpop.f32.mrf.mxu0
  %v1330 = vpop.f32.mrf.mxu0
  %1331 = vdwg.mxu0
  %1332 = vmatprep.subr.bf16.mxu0 %v1144
  %1333 = vmatpush1.bf16.msra.mxu0 %v1143
  %1334 = vmatprep.subr.bf16.mxu0 %v1136
  %1335 = vmatpush1.bf16.msra.mxu0 %v1135
  %1336 = vmatprep.subr.bf16.mxu0 %v1128
  %1337 = vmatpush1.bf16.msra.mxu0 %v1127
  %1338 = vmatprep.subr.bf16.mxu0 %v1120
  %1339 = vmatpush1.bf16.msra.mxu0 %v1119
  %1340 = vmatprep.subr.bf16.mxu0 %v1112
  %1341 = vmatpush1.bf16.msra.mxu0 %v1111
  %1342 = vmatprep.subr.bf16.mxu0 %v1104
  %1343 = vmatpush1.bf16.msra.mxu0 %v1103
  %1344 = vmatprep.subr.bf16.mxu0 %v1096
  %1345 = vmatpush1.bf16.msra.mxu0 %v1095
  %1346 = vmatprep.subr.bf16.mxu0 %v1088
  %1347 = vmatpush1.bf16.msra.mxu0 %v1087
  %1348 = vmatprep.subr.bf16.mxu0 0
  %1349 = vmatpush2.bf16.msra.mxu0 0
  %1350 = vmatprep.subr.bf16.mxu0 0
  %1351 = vmatpush2.bf16.msra.mxu0 0
  %1352 = vmatprep.subr.bf16.mxu0 0
  %1353 = vmatpush2.bf16.msra.mxu0 0
  %1354 = vmatprep.subr.bf16.mxu0 0
  %1355 = vmatpush2.bf16.msra.mxu0 0
  %1356 = vmatprep.subr.bf16.mxu0 0
  %1357 = vmatpush2.bf16.msra.mxu0 0
  %1358 = vmatprep.subr.bf16.mxu0 0
  %1359 = vmatpush2.bf16.msra.mxu0 0
  %1360 = vmatprep.subr.bf16.mxu0 0
  %1361 = vmatpush2.bf16.msra.mxu0 0
  %1362 = vmatprep.subr.bf16.mxu0 0
  %1363 = vmatpush2.bf16.msra.mxu0 0
  %1364 = vmatprep.mubr.bf16.mxu0 0
  %1365 = vmatmul.mubr.bf16.gmra.mxu0 %v782
  %v1366 = vpop.f32.mrf.mxu0
  %v1367 = vadd.f32 %v876, %v1366
  %v1368 = vpop.f32.mrf.mxu0
  %v1369 = vadd.f32 %v880, %v1368
  %v1370 = vpop.f32.mrf.mxu0
  %v1371 = vpop.f32.mrf.mxu0
  %1372 = vdwg.mxu0
  %v1381 = vcombine.low %v1244, %v1246
  %v1382 = vcombine.low %v1285, %v1287
  %v1384 = vunpack.c.l.s4 1983009808
  %v1385 = vunpack.c.0.s8 %v1384
  %v1386 = vlaneseq
  %v1387 = vshrl.u32 %v1386, 7
  %v1388 = vsub.s32 %v1385, %v1387
  %v1389 = vrot.slane %v1381, %v1388
  %v1391 = vunpack.c.l.s4 1983009808
  %v1392 = vunpack.c.0.s8 %v1391
  %v1393 = vlaneseq
  %v1394 = vshrl.u32 %v1393, 7
  %v1395 = vsub.s32 %v1392, %v1394
  %v1396 = vrot.slane %v1382, %v1395
  %v1397 = vcombine.low %v1389, %v1396
  %v1398 = vcombine.low %v1326, %v1328
  %v1399 = vcombine.low %v1367, %v1369
  %v1401 = vunpack.c.l.s4 1983009808
  %v1402 = vunpack.c.0.s8 %v1401
  %v1403 = vlaneseq
  %v1404 = vshrl.u32 %v1403, 7
  %v1405 = vsub.s32 %v1402, %v1404
  %v1406 = vrot.slane %v1398, %v1405
  %v1408 = vunpack.c.l.s4 1983009808
  %v1409 = vunpack.c.0.s8 %v1408
  %v1410 = vlaneseq
  %v1411 = vshrl.u32 %v1410, 7
  %v1412 = vsub.s32 %v1409, %v1411
  %v1413 = vrot.slane %v1399, %v1412
  %v1414 = vcombine.low %v1406, %v1413
  %1417 = vst [vmem:[%s6] sm:$0xff] %v1397
  %1418 = vst [vmem:[%s6 + $0x8] sm:$0xff] %v1414
  %1419 = vst [vmem:[%s7] sm:$0x3] %v781
  // Predicated region
  $region26: #{base_vae_forward.1} parent=0 // pred_check
    _
  $region27: #{base_vae_forward.1} parent=0 // pred_check_branch
    %1421 = sbr.rel (0) target = $region29
  $region28: #{base_vae_forward.1} parent=0 // pred_region
    _
  $region29: #{base_vae_forward.1} parent=0 // pred_fallthru
    _
  // Predicated region
  $region30: #{base_vae_forward.1} parent=0 // pred_check
    _
  $region31: #{base_vae_forward.1} parent=0 // pred_check_branch
    %1423 = sbr.rel (0) target = $region33
  $region32: #{base_vae_forward.1} parent=0 // pred_region
    _
  $region33: #{base_vae_forward.1} parent=0 // pred_fallthru
    _
  // Predicated region
  $region34: #{base_vae_forward.1} parent=0 // pred_check
    _
  $region35: #{base_vae_forward.1} parent=0 // pred_check_branch
    %1425 = sbr.rel (0) target = $region37
  $region36: #{base_vae_forward.1} parent=0 // pred_region
    _
  $region37: #{base_vae_forward.1} parent=0 // pred_fallthru
    _
  // Predicated region
  $region38: #{base_vae_forward.1} parent=0 // pred_check
    _
  $region39: #{base_vae_forward.1} parent=0 // pred_check_branch
    %1427 = sbr.rel (0) target = $region41
  $region40: #{base_vae_forward.1} parent=0 // pred_region
    _
  $region41: #{base_vae_forward.1} parent=0 // pred_fallthru
    _

</llo_original>
